<compile_context>
chip_gen: v6e
topology: v6e:2x2x1
jax: 0.10.0
libtpu: 0.0.40
codegen_flags: <defaults>
</compile_context>

<pallas_src>
import functools

import jax
import jax.numpy as jnp
from jax import lax
from jax.experimental import pallas as pl
from jax.experimental.pallas import tpu as pltpu

_EPS = 1e-5  # PyTorch default for BatchNorm2d and InstanceNorm2d

# Conservative VMEM budgets (bytes): stay well under every generation's default
# scoped-VMEM limit (16 MiB on v5e) so we never need to raise vmem_limit_bytes.
_SINGLE_SHOT_VMEM = 8 * 1024 * 1024   # whole-problem, un-gridded path
_GROUP_BLOCK_VMEM = 8 * 1024 * 1024   # in+out blocks, double-buffered
_SMALL_PROBLEM = 1 * 1024 * 1024      # below this, one step beats a pipeline


def _sublane_multiple(dtype):
    return {4: 8, 2: 16, 1: 32}.get(jnp.dtype(dtype).itemsize, 8)


# ----------------------------------------------------------------------------
# Kernel A: whole problem in one un-gridded invocation (dense 2-D row view).
#   x_ref/o_ref : (N*C, H*W)  rows ordered sample-major (row = n*C + c)
#   gamma_ref   : (N*C, 1)    BN weight per row (1.0 on InstanceNorm rows)
#   beta_ref    : (N*C, 1)    BN bias per row   (0.0 on InstanceNorm rows)
#   mask_ref    : (N*C, 1)    1.0 on BatchNorm rows, 0.0 on InstanceNorm rows
# ----------------------------------------------------------------------------
def _ibnorm_rows_kernel(x_ref, gamma_ref, beta_ref, mask_ref, o_ref, *, eps, n, c):
    hw = x_ref.shape[1]
    x = x_ref[...].astype(jnp.float32)
    use_bn = mask_ref[...] > 0.0                              # (R, 1) bool

    # Aggregate the N rows that share a channel with XLU sublane rolls
    # (row r and row r +/- k*C hold the same channel).
    def _sum_over_samples(v):
        total = v
        for k in range(1, n):
            total = total + pltpu.roll(v, k * c, 0)
        return total

    s = jnp.sum(x, axis=1, keepdims=True)                     # (R, 1) row sums
    mean = jnp.where(use_bn,
                     _sum_over_samples(s) * (1.0 / (n * hw)),  # per-channel
                     s * (1.0 / hw))                           # per-(n, c)
    d = x - mean
    q = jnp.sum(d * d, axis=1, keepdims=True)                 # centered 2nd moment
    var = jnp.where(use_bn,
                    _sum_over_samples(q) * (1.0 / (n * hw)),
                    q * (1.0 / hw))

    scale = gamma_ref[...] * lax.rsqrt(var + eps)             # EUP rsqrt
    o_ref[...] = (d * scale + beta_ref[...]).astype(o_ref.dtype)


# ----------------------------------------------------------------------------
# Kernel B: one grid step = one self-contained channel group.
#   x_ref/o_ref            : (N, CG, H*W)
#   gamma/beta/mask_ref    : (1, CG, 1)
# ----------------------------------------------------------------------------
def _ibnorm_group_kernel(x_ref, gamma_ref, beta_ref, mask_ref, o_ref, *, eps):
    n, _, hw = x_ref.shape
    x = x_ref[...].astype(jnp.float32)
    use_bn = mask_ref[...] > 0.0                              # (1, CG, 1)

    s = jnp.sum(x, axis=2, keepdims=True)                     # (N, CG, 1)
    mean = jnp.where(use_bn,
                     jnp.sum(s, axis=0, keepdims=True) * (1.0 / (n * hw)),
                     s * (1.0 / hw))
    d = x - mean
    q = jnp.sum(d * d, axis=2, keepdims=True)
    var = jnp.where(use_bn,
                    jnp.sum(q, axis=0, keepdims=True) * (1.0 / (n * hw)),
                    q * (1.0 / hw))

    scale = gamma_ref[...] * lax.rsqrt(var + eps)
    o_ref[...] = (d * scale + beta_ref[...]).astype(o_ref.dtype)


def _pick_channel_group(C, bytes_per_channel, sub):
    """Largest multiple-of-`sub` proper divisor of C whose double-buffered
    (in + out) block fits the budget."""
    best = None
    for cg in range(sub, C, sub):
        if C % cg == 0 and 4 * cg * bytes_per_channel <= _GROUP_BLOCK_VMEM:
            best = cg
    return best


# ----------------------------------------------------------------------------
# Wrapper: layout plumbing (free reshapes only, no transposes) + dispatch.
# ----------------------------------------------------------------------------
def ibnorm_forward(x, gamma, beta, *, eps=_EPS, channel_group=None):
    N, C, H, W = x.shape
    cb = C // 2                 # BatchNorm channels (first half)
    ci = C - cb                 # InstanceNorm channels (second half)
    HW = H * W
    itemsize = jnp.dtype(x.dtype).itemsize
    sub = _sublane_multiple(x.dtype)

    # Fold the affine over the full channel range (identity on the IN half)
    # and build the BN/IN selector; tiny per-channel vectors.
    g_full = jnp.concatenate([gamma.astype(jnp.float32),
                              jnp.ones((ci,), jnp.float32)])
    b_full = jnp.concatenate([beta.astype(jnp.float32),
                              jnp.zeros((ci,), jnp.float32)])
    m_full = jnp.concatenate([jnp.ones((cb,), jnp.float32),
                              jnp.zeros((ci,), jnp.float32)])

    total_bytes = 2 * N * C * HW * itemsize        # x in + out
    bytes_per_channel = N * HW * itemsize

    cg = channel_group
    if cg is None:
        if total_bytes > _SMALL_PROBLEM and C % sub == 0:
            cg = _pick_channel_group(C, bytes_per_channel, sub)
        if cg is None and total_bytes > _SINGLE_SHOT_VMEM:
            # TODO(synk): shapes whose per-channel (N, H*W) slab alone blows the
            # VMEM budget need an HW-tiled two-pass (stats, then normalize)
            # pipeline; not implemented here.
            raise NotImplementedError(
                "IBNorm Pallas kernel: problem too large for the implemented "
                "single-shot / channel-group tilings")
    else:
        if C % cg != 0 or (cg % sub != 0 and cg != C):
            raise ValueError(
                f"channel_group must divide C and be a multiple of {sub} "
                f"for dtype {x.dtype}")

    if cg is None:
        # ---- Single un-gridded invocation on the dense 2-D row view. -------
        # NOTE: if H*W is not a multiple of 128 this stays correct, only with
        # masked lane stores.
        x2 = x.reshape(N * C, HW)
        g_r = jnp.tile(g_full, N).reshape(N * C, 1)
        b_r = jnp.tile(b_full, N).reshape(N * C, 1)
        m_r = jnp.tile(m_full, N).reshape(N * C, 1)
        kernel = functools.partial(_ibnorm_rows_kernel, eps=eps, n=N, c=C)
        vmem = pl.BlockSpec(memory_space=pltpu.MemorySpace.VMEM)
        out = pl.pallas_call(
            kernel,
            out_shape=jax.ShapeDtypeStruct((N * C, HW), x.dtype),
            in_specs=[vmem, vmem, vmem, vmem],
            out_specs=vmem,
        )(x2, g_r, b_r, m_r)
        return out.reshape(N, C, H, W)

    # ---- Channel-group tiled path: independent groups, pipelined/parallel. -
    x3 = x.reshape(N, C, HW)
    g3 = g_full.reshape(1, C, 1)
    b3 = b_full.reshape(1, C, 1)
    m3 = m_full.reshape(1, C, 1)
    kernel = functools.partial(_ibnorm_group_kernel, eps=eps)
    data_spec = pl.BlockSpec((N, cg, HW), lambda g: (0, g, 0))
    chan_spec = pl.BlockSpec((1, cg, 1), lambda g: (0, g, 0))
    out = pl.pallas_call(
        kernel,
        out_shape=jax.ShapeDtypeStruct((N, C, HW), x.dtype),
        grid=(C // cg,),
        in_specs=[data_spec, chan_spec, chan_spec, chan_spec],
        out_specs=data_spec,
        compiler_params=pltpu.CompilerParams(
            dimension_semantics=("parallel",)),
    )(x3, g3, b3, m3)
    return out.reshape(N, C, H, W)


# ----------------------------------------------------------------------------
# Pure-JAX reference (mirrors PyTorch IBNorm.forward in train mode).
# ----------------------------------------------------------------------------
def ibnorm_reference(x, gamma, beta, *, eps=_EPS):
    N, C, H, W = x.shape
    cb = C // 2

    xb = x[:, :cb]
    mb = xb.mean(axis=(0, 2, 3), keepdims=True)
    vb = ((xb - mb) ** 2).mean(axis=(0, 2, 3), keepdims=True)   # biased var
    bn = (xb - mb) / jnp.sqrt(vb + eps)
    bn = bn * gamma[None, :, None, None] + beta[None, :, None, None]

    xi = x[:, cb:]
    mi = xi.mean(axis=(2, 3), keepdims=True)
    vi = ((xi - mi) ** 2).mean(axis=(2, 3), keepdims=True)
    inn = (xi - mi) / jnp.sqrt(vi + eps)

    return jnp.concatenate([bn, inn], axis=1)


if __name__ == "__main__":
    key = jax.random.PRNGKey(0)
    k1, k2, k3, k4, k5, k6 = jax.random.split(key, 6)

    # 1) Demo shape -> single-shot dense-row path.
    N, C, H, W = 2, 4, 16, 16
    x = jax.random.normal(k1, (N, C, H, W), jnp.float32)
    gamma = 1.0 + 0.1 * jax.random.normal(k2, (C // 2,), jnp.float32)
    beta = 0.1 * jax.random.normal(k3, (C // 2,), jnp.float32)

    out = jax.block_until_ready(ibnorm_forward(x, gamma, beta))
    ref = ibnorm_reference(x, gamma, beta)
    assert out.shape == ref.shape and out.dtype == ref.dtype
    assert float(jnp.max(jnp.abs(out - ref))) < 1e-4

    # 2) Exercise the channel-group-tiled path (two groups of 8 channels).
    N2, C2 = 2, 16
    x2 = jax.random.normal(k4, (N2, C2, H, W), jnp.float32)
    gamma2 = 1.0 + 0.1 * jax.random.normal(k5, (C2 // 2,), jnp.float32)
    beta2 = 0.1 * jax.random.normal(k6, (C2 // 2,), jnp.float32)

    out2 = jax.block_until_ready(
        ibnorm_forward(x2, gamma2, beta2, channel_group=8))
    ref2 = ibnorm_reference(x2, gamma2, beta2)
    assert float(jnp.max(jnp.abs(out2 - ref2))) < 1e-4

    print("KERNEL_OK")
</pallas_src>

<mosaic_0001>
module attributes {stable_mosaic.version = 11 : i64} {
  func.func @_ibnorm_rows_kernel(%arg0: memref<8x256xf32, #tpu.memory_space<vmem>>, %arg1: memref<8x1xf32, #tpu.memory_space<vmem>>, %arg2: memref<8x1xf32, #tpu.memory_space<vmem>>, %arg3: memref<8x1xf32, #tpu.memory_space<vmem>>, %arg4: memref<8x256xf32, #tpu.memory_space<vmem>>) attributes {dimension_semantics = [], scalar_prefetch = 0 : i64, scratch_operands = 0 : i64, tpu.core_type = #tpu.core_type<tc>} {
    %c0 = arith.constant 0 : index
    %c0_0 = arith.constant 0 : index
    %0 = vector.load %arg0[%c0, %c0_0] : memref<8x256xf32, #tpu.memory_space<vmem>>, vector<8x256xf32>
    %c0_1 = arith.constant 0 : index
    %c0_2 = arith.constant 0 : index
    %1 = vector.load %arg3[%c0_1, %c0_2] : memref<8x1xf32, #tpu.memory_space<vmem>>, vector<8x1xf32>
    %cst = arith.constant 0.000000e+00 : f32
    %2 = vector.broadcast %cst : f32 to vector<8x1xf32>
    %3 = arith.cmpf ogt, %1, %2 : vector<8x1xf32>
    %cst_3 = arith.constant dense<0.000000e+00> : vector<8xf32>
    %4 = vector.multi_reduction <add>, %0, %cst_3 [1] : vector<8x256xf32> to vector<8xf32>
    %5 = vector.shape_cast %4 : vector<8xf32> to vector<8x1xf32>
    %c4_i32 = arith.constant 4 : i32
    %6 = tpu.dynamic_rotate %5 by %c4_i32 dim 0 : vector<8x1xf32>, i32 -> vector<8x1xf32>
    %7 = arith.addf %5, %6 : vector<8x1xf32>
    %cst_4 = arith.constant 0.001953125 : f32
    %8 = vector.broadcast %cst_4 : f32 to vector<8x1xf32>
    %9 = arith.mulf %7, %8 : vector<8x1xf32>
    %cst_5 = arith.constant 3.906250e-03 : f32
    %10 = vector.broadcast %cst_5 : f32 to vector<8x1xf32>
    %11 = arith.mulf %5, %10 : vector<8x1xf32>
    %12 = arith.select %3, %9, %11 : vector<8x1xi1>, vector<8x1xf32>
    %13 = vector.broadcast %12 : vector<8x1xf32> to vector<8x256xf32>
    %14 = arith.subf %0, %13 : vector<8x256xf32>
    %15 = arith.mulf %14, %14 : vector<8x256xf32>
    %cst_6 = arith.constant dense<0.000000e+00> : vector<8xf32>
    %16 = vector.multi_reduction <add>, %15, %cst_6 [1] : vector<8x256xf32> to vector<8xf32>
    %17 = vector.shape_cast %16 : vector<8xf32> to vector<8x1xf32>
    %c4_i32_7 = arith.constant 4 : i32
    %18 = tpu.dynamic_rotate %17 by %c4_i32_7 dim 0 : vector<8x1xf32>, i32 -> vector<8x1xf32>
    %19 = arith.addf %17, %18 : vector<8x1xf32>
    %cst_8 = arith.constant 0.001953125 : f32
    %20 = vector.broadcast %cst_8 : f32 to vector<8x1xf32>
    %21 = arith.mulf %19, %20 : vector<8x1xf32>
    %cst_9 = arith.constant 3.906250e-03 : f32
    %22 = vector.broadcast %cst_9 : f32 to vector<8x1xf32>
    %23 = arith.mulf %17, %22 : vector<8x1xf32>
    %24 = arith.select %3, %21, %23 : vector<8x1xi1>, vector<8x1xf32>
    %c0_10 = arith.constant 0 : index
    %c0_11 = arith.constant 0 : index
    %25 = vector.load %arg1[%c0_10, %c0_11] : memref<8x1xf32, #tpu.memory_space<vmem>>, vector<8x1xf32>
    %cst_12 = arith.constant 9.99999974E-6 : f32
    %26 = vector.broadcast %cst_12 : f32 to vector<8x1xf32>
    %27 = arith.addf %24, %26 : vector<8x1xf32>
    %28 = math.rsqrt %27 : vector<8x1xf32>
    %29 = arith.mulf %25, %28 : vector<8x1xf32>
    %30 = vector.broadcast %29 : vector<8x1xf32> to vector<8x256xf32>
    %31 = arith.mulf %14, %30 : vector<8x256xf32>
    %c0_13 = arith.constant 0 : index
    %c0_14 = arith.constant 0 : index
    %32 = vector.load %arg2[%c0_13, %c0_14] : memref<8x1xf32, #tpu.memory_space<vmem>>, vector<8x1xf32>
    %33 = vector.broadcast %32 : vector<8x1xf32> to vector<8x256xf32>
    %34 = arith.addf %31, %33 : vector<8x256xf32>
    %c0_15 = arith.constant 0 : index
    %c0_16 = arith.constant 0 : index
    %35 = vector.load %arg4[%c0_15, %c0_16] : memref<8x256xf32, #tpu.memory_space<vmem>>, vector<8x256xf32>
    tpu.vector_store %arg4[%c0_15, %c0_16], %34 {strides = array<i32>} : memref<8x256xf32, #tpu.memory_space<vmem>>, vector<8x256xf32>,
    return
  }
}

</mosaic_0001>

<llo_original>
// kernel: tpu_custom_call.1
$region0: #{tpu_custom_call.1}
  #allocation0 [shape = 'u32[]', space=smem, size = 0x4, offset = 0x4, fixed_abs, tag = 'smem constant byte address 0x4 - core index']
  #allocation1 [shape = 'u32[144,128]{1,0:T(1,128)}', space=vmem, size = 0x12000, scoped, tag = 'internal scratch']
  %s0 = inlined_call_operand.vmem [shape: f32[8,256], index: 0, kind: input, shape index: {}]
  %s1 = inlined_call_operand.vmem [shape: f32[8,1], index: 1, kind: input, shape index: {}]
  %s2 = inlined_call_operand.vmem [shape: f32[8,1], index: 2, kind: input, shape index: {}]
  %s3 = inlined_call_operand.vmem [shape: f32[8,1], index: 3, kind: input, shape index: {}]
  %s4 = inlined_call_operand.hbm [shape: f32[8,256], index: 4, kind: output, shape index: {}]
  %s5 = sld [smem:[#allocation0]]
  $region26: #{tpu_custom_call.1} parent=0
    _
  %s7 = ssub.s32 1, %s5
  %s8 = scalar_select 0, %s7, %s5
  $region1: #{tpu_custom_call.1} parent=0
    #allocation2 [shape = 'u8[8192]{0}', space=vmem, size = 0x2000, scoped, tag = 'output window, operand 0, single buffered']
    #allocation3 [shape = 's32[1]{0}', space=sflag, size = 0x4, scoped, tag = 'scoped memory for tpu_custom_call.1']
    %9 = vsyncpa [#allocation3], 0
    // Predicated region
    $region2: #{tpu_custom_call.1} parent=1 // pred_check
      _
    $region3: #{tpu_custom_call.1} parent=1 // pred_check_branch
      %11 = sbr.rel (0) target = $region5
    $region4: #{tpu_custom_call.1} parent=1 // pred_region
      _
    $region5: #{tpu_custom_call.1} parent=1 // pred_fallthru
      _
    // Predicated region
    $region6: #{tpu_custom_call.1} parent=1 // pred_check
      _
    $region7: #{tpu_custom_call.1} parent=1 // pred_check_branch
      %13 = sbr.rel (0) target = $region9
    $region8: #{tpu_custom_call.1} parent=1 // pred_region
      _
    $region9: #{tpu_custom_call.1} parent=1 // pred_fallthru
      _
    // Predicated region
    $region10: #{tpu_custom_call.1} parent=1 // pred_check
      _
    $region11: #{tpu_custom_call.1} parent=1 // pred_check_branch
      %15 = sbr.rel (0) target = $region13
    $region12: #{tpu_custom_call.1} parent=1 // pred_region
      _
    $region13: #{tpu_custom_call.1} parent=1 // pred_fallthru
      _
    // Predicated region
    $region14: #{tpu_custom_call.1} parent=1 // pred_check
      _
    $region15: #{tpu_custom_call.1} parent=1 // pred_check_branch
      %17 = sbr.rel (0) target = $region17
    $region16: #{tpu_custom_call.1} parent=1 // pred_region
      _
    $region17: #{tpu_custom_call.1} parent=1 // pred_fallthru
      _
    %v18 = vld [vmem:[%s0] sm:$0xff]
    %v19 = vld [vmem:[%s0 + $0x8] sm:$0xff]
    %v20 = vld [vmem:[%s3] sm:$0xff]
    %vm21 = vcmp.gt.f32.partialorder %v20, 0.0
    %v22 = vadd.f32 %v18, %v19
    %23 = vadd.xlane.f32.xlu0 %v22
    %v24 = vpop.xlane.xlu0 %23
    %v25 = vrot.slane %v24, 4
    %v26 = vadd.f32 %v24, %v25
    %v27 = vmul.f32 %v26, 0.001953125
    %v28 = vmul.f32 %v24, 0.00390625
    %v29 = vsel %vm21, %v27, %v28
    %31 = vset.pattern.permute.xlu0 0
    %32 = vperm.xlu0 %31, %v29
    %v33 = vpop.permute.xlu0 %32
    %v35 = vsub.f32 %v18, %v33
    %v36 = vsub.f32 %v19, %v33
    %v37 = vmul.f32 %v35, %v35
    %v38 = vmul.f32 %v36, %v36
    %v39 = vadd.f32 %v37, %v38
    %40 = vadd.xlane.f32.xlu0 %v39
    %v41 = vpop.xlane.xlu0 %40
    %v42 = vrot.slane %v41, 4
    %v43 = vadd.f32 %v41, %v42
    %v44 = vmul.f32 %v43, 0.001953125
    %v45 = vmul.f32 %v41, 0.00390625
    %v46 = vsel %vm21, %v44, %v45
    %v47 = vld [vmem:[%s1] sm:$0xff]
    %v48 = vadd.f32 %v46, 1e-05
    %v49 = vrsqrt.pop %v48
    %v50 = vmul.f32 %v47, %v49
    %52 = vset.pattern.permute.xlu0 0
    %53 = vperm.xlu0 %52, %v50
    %v54 = vpop.permute.xlu0 %53
    %v56 = vmul.f32 %v35, %v54
    %v57 = vmul.f32 %v36, %v54
    %v58 = vld [vmem:[%s2] sm:$0xff]
    %60 = vset.pattern.permute.xlu0 0
    %61 = vperm.xlu0 %60, %v58
    %v62 = vpop.permute.xlu0 %61
    %v64 = vadd.f32 %v56, %v62
    %v65 = vadd.f32 %v57, %v62
    %66 = vst [vmem:[#allocation2] sm:$0xff] %v64
    %67 = vst [vmem:[#allocation2 + $0x8] sm:$0xff] %v65
    // Predicated region
    $region18: #{tpu_custom_call.1} parent=1 // pred_check
      _
    $region19: #{tpu_custom_call.1} parent=1 // pred_check_branch
      %69 = sbr.rel (0) target = $region21
    $region20: #{tpu_custom_call.1} parent=1 // pred_region
      %s71 = ssub.s32 256, 256
      %72 = vsyncadd [#allocation3], %s71
      %s74 = sshll.u32 [#allocation2], 4
      %s75 = int_to_ptr.vmem [resolvable:$true] %s74
      %77 = dma.vmem_to_hbm [thread:$0]  %s75, 256, %s4, [#allocation3]
    $region21: #{tpu_custom_call.1} parent=1 // pred_fallthru
      _
    // Predicated region
    $region22: #{tpu_custom_call.1} parent=1 // pred_check
      _
    $region23: #{tpu_custom_call.1} parent=1 // pred_check_branch
      %79 = sbr.rel (0) target = $region25
    $region24: #{tpu_custom_call.1} parent=1 // pred_region
      %80 = dma.done [#allocation3], 256
    $region25: #{tpu_custom_call.1} parent=1 // pred_fallthru
      _
    %81 = vsyncpa [#allocation3], 1

</llo_original>
